<compile_context>
chip_gen: v7x
topology: tpu7x:2x2x1
jax: 0.10.0
libtpu: 0.0.40
codegen_flags: <defaults>
</compile_context>

<pallas_src>
import functools

import jax
import jax.numpy as jnp
from jax import lax
from jax.experimental import pallas as pl
from jax.experimental.pallas import tpu as pltpu


def lstm_kernel(x_ref, wx_ref, wh_ref, b_ref, wp_ref, bp_ref, out_ref, *,
                seq, batch_p, hidden, num_classes):
    four_h = 4 * hidden

    # Hoist all weight loads out of the recurrence.
    wx = wx_ref[...]                      # (emb, 4H)    bf16 (i/f/o cols pre-scaled 0.5)
    wh = wh_ref[...]                      # (hidden, 4H) bf16 (i/f/o cols pre-scaled 0.5)
    b = b_ref[...]                        # (1, 4H)      f32  (i/f/o cols pre-scaled 0.5)

    # Input projection has no recurrent dependency: one (seq*B, emb) x (emb, 4H)
    # bf16 MXU matmul with f32 accumulation, for every timestep at once.
    x_proj = jnp.dot(x_ref[...], wx, preferred_element_type=jnp.float32) + b

    # Hoisted gate masks / affine constants.
    # g lanes: act = tanh(pre); i/f/o lanes: act = 0.5*tanh(pre) + 0.5  (= sigmoid,
    # because the 0.5 input scale is already folded into wx/wh/b).
    lane = lax.broadcasted_iota(jnp.int32, (batch_p, four_h), 1)
    is_g = lane >= 3 * hidden
    out_scale = jnp.where(is_g, jnp.float32(1.0), jnp.float32(0.5))
    out_shift = jnp.where(is_g, jnp.float32(0.0), jnp.float32(0.5))

    h = jnp.zeros((batch_p, hidden), jnp.float32)
    c = jnp.zeros((batch_p, hidden), jnp.float32)

    # Fully unrolled recurrence (seq is small & static); h/c live in vregs. Serial
    # chain per step: one bf16 MXU op + one full-vreg EUP tanh + VPU/XLU epilogue.
    for t in range(seq):
        pre = x_proj[t * batch_p:(t + 1) * batch_p, :] + jnp.dot(
            h.astype(jnp.bfloat16), wh, preferred_element_type=jnp.float32)
        act = jnp.tanh(pre) * out_scale + out_shift          # single tanh for all gates
        i_t = act[:, 0 * hidden:1 * hidden]                  # lane offset 0: free slice
        f_t = act[:, 1 * hidden:2 * hidden]
        o_t = act[:, 2 * hidden:3 * hidden]
        g_t = act[:, 3 * hidden:4 * hidden]
        c = g_t * i_t + c * f_t
        h = jnp.tanh(c) * o_t

    # Final projection + log_softmax restricted to the first num_classes lanes.
    p = jnp.dot(h.astype(jnp.bfloat16), wp_ref[...],
                preferred_element_type=jnp.float32) + bp_ref[...]
    cls_lane = lax.broadcasted_iota(jnp.int32, p.shape, 1)
    valid = cls_lane < num_classes
    m = jnp.max(jnp.where(valid, p, jnp.float32(-1e30)), axis=1, keepdims=True)
    z = p - m
    e = jnp.where(valid, jnp.exp(z), jnp.float32(0.0))
    out_ref[...] = z - jnp.log(jnp.sum(e, axis=1, keepdims=True))


def prepare_params(W_ix, W_fx, W_ox, W_gx, W_ih, W_fh, W_oh, W_gh,
                   b_i, b_f, b_o, b_g, W_ph, b_p, *, hidden, num_classes):
    """Fuse / scale / pad static parameters once, outside the per-call hot path."""
    wx = jnp.concatenate([W_ix, W_fx, W_ox, W_gx], axis=1)          # (emb, 4H)
    wh = jnp.concatenate([W_ih, W_fh, W_oh, W_gh], axis=1)          # (hidden, 4H)
    b = jnp.concatenate([b_i, b_f, b_o, b_g])[None, :]              # (1, 4H)

    # Fold the 0.5 input scale of sigmoid(x) = 0.5*tanh(x/2) + 0.5 into i/f/o cols.
    scale = jnp.concatenate([jnp.full((3 * hidden,), 0.5, jnp.float32),
                             jnp.ones((hidden,), jnp.float32)])[None, :]
    wx_s = (wx * scale).astype(jnp.bfloat16)
    wh_s = (wh * scale).astype(jnp.bfloat16)
    b_s = (b * scale).astype(jnp.float32)

    ncl_pad = max(128, ((num_classes + 127) // 128) * 128)          # lane-dense output
    wp_pad = jnp.pad(W_ph, ((0, 0), (0, ncl_pad - num_classes))).astype(jnp.bfloat16)
    bp_pad = jnp.pad(b_p, ((0, 0), (0, ncl_pad - num_classes))).astype(jnp.float32)
    return wx_s, wh_s, b_s, wp_pad, bp_pad


def prepare_input(x_ids, emb_table, *, batch_p):
    """Token ids (batch, seq) -> time-major, batch-padded, flattened bf16 embeddings.

    The transpose / padding are done on the tiny int id array, so no separate HBM
    transpose pass over the float embeddings is needed.
    """
    batch, seq = x_ids.shape
    ids_tm = jnp.pad(x_ids.T, ((0, 0), (0, batch_p - batch)))       # (seq, batch_p)
    x = emb_table[ids_tm]                                           # (seq, batch_p, emb)
    return x.reshape(seq * batch_p, -1).astype(jnp.bfloat16)        # (seq*batch_p, emb)


def lstm_forward(x2d, wx_s, wh_s, b_s, wp_pad, bp_pad, *,
                 seq, batch_p, hidden, num_classes):
    four_h = wx_s.shape[1]
    ncl_pad = wp_pad.shape[1]
    emb = x2d.shape[1]
    assert four_h == 4 * hidden

    vmem = pl.BlockSpec(memory_space=pltpu.MemorySpace.VMEM)

    flops = (2 * seq * batch_p * emb * four_h
             + 2 * seq * batch_p * hidden * four_h
             + 2 * batch_p * hidden * ncl_pad)
    transcendentals = seq * batch_p * (four_h + hidden) + batch_p * ncl_pad
    args = (x2d, wx_s, wh_s, b_s, wp_pad, bp_pad)
    bytes_accessed = (sum(a.size * a.dtype.itemsize for a in args)
                      + batch_p * ncl_pad * 4)

    out_pad = pl.pallas_call(
        functools.partial(lstm_kernel, seq=seq, batch_p=batch_p,
                          hidden=hidden, num_classes=num_classes),
        out_shape=jax.ShapeDtypeStruct((batch_p, ncl_pad), jnp.float32),
        in_specs=[vmem] * 6,
        out_specs=vmem,
        cost_estimate=pl.CostEstimate(flops=flops,
                                      transcendentals=transcendentals,
                                      bytes_accessed=bytes_accessed),
    )(*args)
    return out_pad


def kaiming_normal(key, shape, gain):
    # PyTorch kaiming_normal_ (mode='fan_in'): std = gain / sqrt(fan_in), fan_in = shape[1]
    fan_in = shape[1]
    std = gain / jnp.sqrt(jnp.float32(fan_in))
    return std * jax.random.normal(key, shape, dtype=jnp.float32)


def reference_forward(x_ids, emb_table, wx, wh, b, w_ph, b_p,
                      *, batch, seq_length, hidden_dim):
    # Pure-JAX f32 reference mirroring the PyTorch module. Stacked gate order [g, i, f, o].
    x_emb = emb_table[x_ids]                      # (batch, seq, emb)
    h = jnp.zeros((batch, hidden_dim), jnp.float32)
    c = jnp.zeros((batch, hidden_dim), jnp.float32)
    for t in range(seq_length):
        x_t = x_emb[:, t, :]
        g = jnp.tanh(x_t @ wx[0] + h @ wh[0] + b[0])
        i = jax.nn.sigmoid(x_t @ wx[1] + h @ wh[1] + b[1])
        f = jax.nn.sigmoid(x_t @ wx[2] + h @ wh[2] + b[2])
        o = jax.nn.sigmoid(x_t @ wx[3] + h @ wh[3] + b[3])
        c = g * i + c * f
        h = jnp.tanh(c) * o
    p = h @ w_ph + b_p
    return jax.nn.log_softmax(p, axis=1)


if __name__ == "__main__":
    # Small, deterministic configuration (matches the PyTorch module's shapes).
    seq_length = 8
    embedding_dim = 2 * seq_length       # 16
    hidden_dim = 32
    num_classes = 4
    batch_size = 2
    vocab_size = 3

    key = jax.random.PRNGKey(0)
    keys = jax.random.split(key, 16)

    gain_tanh = 5.0 / 3.0
    gain_sig = 1.0
    gain_lin = 1.0

    W_gx = kaiming_normal(keys[0], (embedding_dim, hidden_dim), gain_tanh)
    W_gh = kaiming_normal(keys[1], (hidden_dim, hidden_dim), gain_tanh)
    W_ix = kaiming_normal(keys[2], (embedding_dim, hidden_dim), gain_sig)
    W_ih = kaiming_normal(keys[3], (hidden_dim, hidden_dim), gain_sig)
    W_fx = kaiming_normal(keys[4], (embedding_dim, hidden_dim), gain_sig)
    W_fh = kaiming_normal(keys[5], (hidden_dim, hidden_dim), gain_sig)
    W_ox = kaiming_normal(keys[6], (embedding_dim, hidden_dim), gain_sig)
    W_oh = kaiming_normal(keys[7], (hidden_dim, hidden_dim), gain_sig)
    W_ph = kaiming_normal(keys[8], (hidden_dim, num_classes), gain_lin)

    b_g = jnp.zeros((hidden_dim,), jnp.float32)
    b_i = jnp.zeros((hidden_dim,), jnp.float32)
    b_f = jnp.zeros((hidden_dim,), jnp.float32)
    b_o = jnp.zeros((hidden_dim,), jnp.float32)
    b_p = jnp.zeros((1, num_classes), jnp.float32)

    # nn.Embedding default init: N(0, 1)
    emb_table = jax.random.normal(keys[9], (vocab_size, embedding_dim), dtype=jnp.float32)

    # Kernel parameters: fused [i,f,o,g], 0.5-scaled i/f/o cols, bf16, padded — once.
    wx_s, wh_s, b_s, wp_pad, bp_pad = prepare_params(
        W_ix, W_fx, W_ox, W_gx, W_ih, W_fh, W_oh, W_gh,
        b_i, b_f, b_o, b_g, W_ph, b_p, hidden=hidden_dim, num_classes=num_classes)

    # Stacked parameters for the pure-JAX f32 reference, gate order [g, i, f, o].
    wx_ref = jnp.stack([W_gx, W_ix, W_fx, W_ox], axis=0)
    wh_ref = jnp.stack([W_gh, W_ih, W_fh, W_oh], axis=0)
    b_ref = jnp.stack([b_g, b_i, b_f, b_o], axis=0)

    # Input: token ids, shape (batch, seq, 1) like the PyTorch usage (squeezed inside forward).
    x = jax.random.randint(keys[10], (batch_size, seq_length, 1), 0, vocab_size, dtype=jnp.int32)
    x_ids = jnp.squeeze(x, axis=-1)                                  # (batch, seq)

    batch_p = max(8, ((batch_size + 7) // 8) * 8)                    # sublane-pad batch
    x2d = prepare_input(x_ids, emb_table, batch_p=batch_p)           # (seq*batch_p, emb) bf16

    out_pad = lstm_forward(x2d, wx_s, wh_s, b_s, wp_pad, bp_pad,
                           seq=seq_length, batch_p=batch_p,
                           hidden=hidden_dim, num_classes=num_classes)
    out_pad = jax.block_until_ready(out_pad)
    out = out_pad[:batch_size, :num_classes]

    ref = reference_forward(x_ids, emb_table, wx_ref, wh_ref, b_ref, W_ph, b_p,
                            batch=batch_size, seq_length=seq_length, hidden_dim=hidden_dim)
    ref = jax.block_until_ready(ref)

    assert out.shape == (batch_size, num_classes)
    # bf16 matmul operands -> loosened tolerance vs the pure-f32 reference.
    assert jnp.allclose(out, ref, atol=5e-2, rtol=5e-2), "mismatch vs JAX reference"

    print("KERNEL_OK")
</pallas_src>

<mosaic_0001>
module attributes {stable_mosaic.version = 11 : i64} {
  func.func @lstm_kernel(%arg0: memref<64x16xbf16, #tpu.memory_space<vmem>>, %arg1: memref<16x128xbf16, #tpu.memory_space<vmem>>, %arg2: memref<32x128xbf16, #tpu.memory_space<vmem>>, %arg3: memref<1x128xf32, #tpu.memory_space<vmem>>, %arg4: memref<32x128xbf16, #tpu.memory_space<vmem>>, %arg5: memref<1x128xf32, #tpu.memory_space<vmem>>, %arg6: memref<8x128xf32, #tpu.memory_space<vmem>>) attributes {dimension_semantics = [], scalar_prefetch = 0 : i64, scratch_operands = 0 : i64, tpu.core_type = #tpu.core_type<tc>} {
    %c0 = arith.constant 0 : index
    %c0_0 = arith.constant 0 : index
    %0 = vector.load %arg1[%c0, %c0_0] : memref<16x128xbf16, #tpu.memory_space<vmem>>, vector<16x128xbf16>
    %c0_1 = arith.constant 0 : index
    %c0_2 = arith.constant 0 : index
    %1 = vector.load %arg2[%c0_1, %c0_2] : memref<32x128xbf16, #tpu.memory_space<vmem>>, vector<32x128xbf16>
    %c0_3 = arith.constant 0 : index
    %c0_4 = arith.constant 0 : index
    %2 = vector.load %arg3[%c0_3, %c0_4] : memref<1x128xf32, #tpu.memory_space<vmem>>, vector<1x128xf32>
    %c0_5 = arith.constant 0 : index
    %c0_6 = arith.constant 0 : index
    %3 = vector.load %arg0[%c0_5, %c0_6] : memref<64x16xbf16, #tpu.memory_space<vmem>>, vector<64x16xbf16>
    %cst = arith.constant dense<0.000000e+00> : vector<64x128xf32>
    %4 = tpu.matmul %3, %0, %cst {dimension_numbers = #tpu.dot_dimension_numbers<[1], [0], [0], [1], [0, 0, 1, 1], [], []>} : vector<64x16xbf16>, vector<16x128xbf16>, vector<64x128xf32> -> vector<64x128xf32>
    %5 = vector.broadcast %2 : vector<1x128xf32> to vector<64x128xf32>
    %6 = arith.addf %4, %5 : vector<64x128xf32>
    %7 = tpu.iota {dimensions = array<i32: 1>} : vector<8x128xi32>
    %c96_i32 = arith.constant 96 : i32
    %8 = vector.broadcast %c96_i32 : i32 to vector<8x128xi32>
    %9 = arith.cmpi sge, %7, %8 : vector<8x128xi32>
    %cst_7 = arith.constant 1.000000e+00 : f32
    %cst_8 = arith.constant 5.000000e-01 : f32
    %10 = vector.broadcast %cst_7 : f32 to vector<8x128xf32>
    %11 = vector.broadcast %cst_8 : f32 to vector<8x128xf32>
    %12 = arith.select %9, %10, %11 : vector<8x128xi1>, vector<8x128xf32>
    %cst_9 = arith.constant 0.000000e+00 : f32
    %cst_10 = arith.constant 5.000000e-01 : f32
    %13 = vector.broadcast %cst_9 : f32 to vector<8x128xf32>
    %14 = vector.broadcast %cst_10 : f32 to vector<8x128xf32>
    %15 = arith.select %9, %13, %14 : vector<8x128xi1>, vector<8x128xf32>
    %cst_11 = arith.constant 0.000000e+00 : f32
    %16 = vector.broadcast %cst_11 : f32 to vector<8x32xf32>
    %cst_12 = arith.constant 0.000000e+00 : f32
    %17 = vector.broadcast %cst_12 : f32 to vector<8x32xf32>
    %18 = vector.extract_strided_slice %6 {offsets = [0, 0], sizes = [8, 128], strides = [1, 1]} : vector<64x128xf32> to vector<8x128xf32>
    %19 = arith.truncf %16 : vector<8x32xf32> to vector<8x32xbf16>
    %cst_13 = arith.constant dense<0.000000e+00> : vector<8x128xf32>
    %20 = tpu.matmul %19, %1, %cst_13 {dimension_numbers = #tpu.dot_dimension_numbers<[1], [0], [0], [1], [0, 0, 1, 1], [], []>} : vector<8x32xbf16>, vector<32x128xbf16>, vector<8x128xf32> -> vector<8x128xf32>
    %21 = arith.addf %18, %20 : vector<8x128xf32>
    %22 = math.tanh %21 : vector<8x128xf32>
    %23 = arith.mulf %22, %12 : vector<8x128xf32>
    %24 = arith.addf %23, %15 : vector<8x128xf32>
    %25 = vector.extract_strided_slice %24 {offsets = [0, 0], sizes = [8, 32], strides = [1, 1]} : vector<8x128xf32> to vector<8x32xf32>
    %26 = vector.extract_strided_slice %24 {offsets = [0, 32], sizes = [8, 32], strides = [1, 1]} : vector<8x128xf32> to vector<8x32xf32>
    %27 = vector.extract_strided_slice %24 {offsets = [0, 64], sizes = [8, 32], strides = [1, 1]} : vector<8x128xf32> to vector<8x32xf32>
    %28 = vector.extract_strided_slice %24 {offsets = [0, 96], sizes = [8, 32], strides = [1, 1]} : vector<8x128xf32> to vector<8x32xf32>
    %29 = arith.mulf %28, %25 : vector<8x32xf32>
    %30 = arith.mulf %17, %26 : vector<8x32xf32>
    %31 = arith.addf %29, %30 : vector<8x32xf32>
    %32 = math.tanh %31 : vector<8x32xf32>
    %33 = arith.mulf %32, %27 : vector<8x32xf32>
    %34 = vector.extract_strided_slice %6 {offsets = [8, 0], sizes = [8, 128], strides = [1, 1]} : vector<64x128xf32> to vector<8x128xf32>
    %35 = arith.truncf %33 : vector<8x32xf32> to vector<8x32xbf16>
    %cst_14 = arith.constant dense<0.000000e+00> : vector<8x128xf32>
    %36 = tpu.matmul %35, %1, %cst_14 {dimension_numbers = #tpu.dot_dimension_numbers<[1], [0], [0], [1], [0, 0, 1, 1], [], []>} : vector<8x32xbf16>, vector<32x128xbf16>, vector<8x128xf32> -> vector<8x128xf32>
    %37 = arith.addf %34, %36 : vector<8x128xf32>
    %38 = math.tanh %37 : vector<8x128xf32>
    %39 = arith.mulf %38, %12 : vector<8x128xf32>
    %40 = arith.addf %39, %15 : vector<8x128xf32>
    %41 = vector.extract_strided_slice %40 {offsets = [0, 0], sizes = [8, 32], strides = [1, 1]} : vector<8x128xf32> to vector<8x32xf32>
    %42 = vector.extract_strided_slice %40 {offsets = [0, 32], sizes = [8, 32], strides = [1, 1]} : vector<8x128xf32> to vector<8x32xf32>
    %43 = vector.extract_strided_slice %40 {offsets = [0, 64], sizes = [8, 32], strides = [1, 1]} : vector<8x128xf32> to vector<8x32xf32>
    %44 = vector.extract_strided_slice %40 {offsets = [0, 96], sizes = [8, 32], strides = [1, 1]} : vector<8x128xf32> to vector<8x32xf32>
    %45 = arith.mulf %44, %41 : vector<8x32xf32>
    %46 = arith.mulf %31, %42 : vector<8x32xf32>
    %47 = arith.addf %45, %46 : vector<8x32xf32>
    %48 = math.tanh %47 : vector<8x32xf32>
    %49 = arith.mulf %48, %43 : vector<8x32xf32>
    %50 = vector.extract_strided_slice %6 {offsets = [16, 0], sizes = [8, 128], strides = [1, 1]} : vector<64x128xf32> to vector<8x128xf32>
    %51 = arith.truncf %49 : vector<8x32xf32> to vector<8x32xbf16>
    %cst_15 = arith.constant dense<0.000000e+00> : vector<8x128xf32>
    %52 = tpu.matmul %51, %1, %cst_15 {dimension_numbers = #tpu.dot_dimension_numbers<[1], [0], [0], [1], [0, 0, 1, 1], [], []>} : vector<8x32xbf16>, vector<32x128xbf16>, vector<8x128xf32> -> vector<8x128xf32>
    %53 = arith.addf %50, %52 : vector<8x128xf32>
    %54 = math.tanh %53 : vector<8x128xf32>
    %55 = arith.mulf %54, %12 : vector<8x128xf32>
    %56 = arith.addf %55, %15 : vector<8x128xf32>
    %57 = vector.extract_strided_slice %56 {offsets = [0, 0], sizes = [8, 32], strides = [1, 1]} : vector<8x128xf32> to vector<8x32xf32>
    %58 = vector.extract_strided_slice %56 {offsets = [0, 32], sizes = [8, 32], strides = [1, 1]} : vector<8x128xf32> to vector<8x32xf32>
    %59 = vector.extract_strided_slice %56 {offsets = [0, 64], sizes = [8, 32], strides = [1, 1]} : vector<8x128xf32> to vector<8x32xf32>
    %60 = vector.extract_strided_slice %56 {offsets = [0, 96], sizes = [8, 32], strides = [1, 1]} : vector<8x128xf32> to vector<8x32xf32>
    %61 = arith.mulf %60, %57 : vector<8x32xf32>
    %62 = arith.mulf %47, %58 : vector<8x32xf32>
    %63 = arith.addf %61, %62 : vector<8x32xf32>
    %64 = math.tanh %63 : vector<8x32xf32>
    %65 = arith.mulf %64, %59 : vector<8x32xf32>
    %66 = vector.extract_strided_slice %6 {offsets = [24, 0], sizes = [8, 128], strides = [1, 1]} : vector<64x128xf32> to vector<8x128xf32>
    %67 = arith.truncf %65 : vector<8x32xf32> to vector<8x32xbf16>
    %cst_16 = arith.constant dense<0.000000e+00> : vector<8x128xf32>
    %68 = tpu.matmul %67, %1, %cst_16 {dimension_numbers = #tpu.dot_dimension_numbers<[1], [0], [0], [1], [0, 0, 1, 1], [], []>} : vector<8x32xbf16>, vector<32x128xbf16>, vector<8x128xf32> -> vector<8x128xf32>
    %69 = arith.addf %66, %68 : vector<8x128xf32>
    %70 = math.tanh %69 : vector<8x128xf32>
    %71 = arith.mulf %70, %12 : vector<8x128xf32>
    %72 = arith.addf %71, %15 : vector<8x128xf32>
    %73 = vector.extract_strided_slice %72 {offsets = [0, 0], sizes = [8, 32], strides = [1, 1]} : vector<8x128xf32> to vector<8x32xf32>
    %74 = vector.extract_strided_slice %72 {offsets = [0, 32], sizes = [8, 32], strides = [1, 1]} : vector<8x128xf32> to vector<8x32xf32>
    %75 = vector.extract_strided_slice %72 {offsets = [0, 64], sizes = [8, 32], strides = [1, 1]} : vector<8x128xf32> to vector<8x32xf32>
    %76 = vector.extract_strided_slice %72 {offsets = [0, 96], sizes = [8, 32], strides = [1, 1]} : vector<8x128xf32> to vector<8x32xf32>
    %77 = arith.mulf %76, %73 : vector<8x32xf32>
    %78 = arith.mulf %63, %74 : vector<8x32xf32>
    %79 = arith.addf %77, %78 : vector<8x32xf32>
    %80 = math.tanh %79 : vector<8x32xf32>
    %81 = arith.mulf %80, %75 : vector<8x32xf32>
    %82 = vector.extract_strided_slice %6 {offsets = [32, 0], sizes = [8, 128], strides = [1, 1]} : vector<64x128xf32> to vector<8x128xf32>
    %83 = arith.truncf %81 : vector<8x32xf32> to vector<8x32xbf16>
    %cst_17 = arith.constant dense<0.000000e+00> : vector<8x128xf32>
    %84 = tpu.matmul %83, %1, %cst_17 {dimension_numbers = #tpu.dot_dimension_numbers<[1], [0], [0], [1], [0, 0, 1, 1], [], []>} : vector<8x32xbf16>, vector<32x128xbf16>, vector<8x128xf32> -> vector<8x128xf32>
    %85 = arith.addf %82, %84 : vector<8x128xf32>
    %86 = math.tanh %85 : vector<8x128xf32>
    %87 = arith.mulf %86, %12 : vector<8x128xf32>
    %88 = arith.addf %87, %15 : vector<8x128xf32>
    %89 = vector.extract_strided_slice %88 {offsets = [0, 0], sizes = [8, 32], strides = [1, 1]} : vector<8x128xf32> to vector<8x32xf32>
    %90 = vector.extract_strided_slice %88 {offsets = [0, 32], sizes = [8, 32], strides = [1, 1]} : vector<8x128xf32> to vector<8x32xf32>
    %91 = vector.extract_strided_slice %88 {offsets = [0, 64], sizes = [8, 32], strides = [1, 1]} : vector<8x128xf32> to vector<8x32xf32>
    %92 = vector.extract_strided_slice %88 {offsets = [0, 96], sizes = [8, 32], strides = [1, 1]} : vector<8x128xf32> to vector<8x32xf32>
    %93 = arith.mulf %92, %89 : vector<8x32xf32>
    %94 = arith.mulf %79, %90 : vector<8x32xf32>
    %95 = arith.addf %93, %94 : vector<8x32xf32>
    %96 = math.tanh %95 : vector<8x32xf32>
    %97 = arith.mulf %96, %91 : vector<8x32xf32>
    %98 = vector.extract_strided_slice %6 {offsets = [40, 0], sizes = [8, 128], strides = [1, 1]} : vector<64x128xf32> to vector<8x128xf32>
    %99 = arith.truncf %97 : vector<8x32xf32> to vector<8x32xbf16>
    %cst_18 = arith.constant dense<0.000000e+00> : vector<8x128xf32>
    %100 = tpu.matmul %99, %1, %cst_18 {dimension_numbers = #tpu.dot_dimension_numbers<[1], [0], [0], [1], [0, 0, 1, 1], [], []>} : vector<8x32xbf16>, vector<32x128xbf16>, vector<8x128xf32> -> vector<8x128xf32>
    %101 = arith.addf %98, %100 : vector<8x128xf32>
    %102 = math.tanh %101 : vector<8x128xf32>
    %103 = arith.mulf %102, %12 : vector<8x128xf32>
    %104 = arith.addf %103, %15 : vector<8x128xf32>
    %105 = vector.extract_strided_slice %104 {offsets = [0, 0], sizes = [8, 32], strides = [1, 1]} : vector<8x128xf32> to vector<8x32xf32>
    %106 = vector.extract_strided_slice %104 {offsets = [0, 32], sizes = [8, 32], strides = [1, 1]} : vector<8x128xf32> to vector<8x32xf32>
    %107 = vector.extract_strided_slice %104 {offsets = [0, 64], sizes = [8, 32], strides = [1, 1]} : vector<8x128xf32> to vector<8x32xf32>
    %108 = vector.extract_strided_slice %104 {offsets = [0, 96], sizes = [8, 32], strides = [1, 1]} : vector<8x128xf32> to vector<8x32xf32>
    %109 = arith.mulf %108, %105 : vector<8x32xf32>
    %110 = arith.mulf %95, %106 : vector<8x32xf32>
    %111 = arith.addf %109, %110 : vector<8x32xf32>
    %112 = math.tanh %111 : vector<8x32xf32>
    %113 = arith.mulf %112, %107 : vector<8x32xf32>
    %114 = vector.extract_strided_slice %6 {offsets = [48, 0], sizes = [8, 128], strides = [1, 1]} : vector<64x128xf32> to vector<8x128xf32>
    %115 = arith.truncf %113 : vector<8x32xf32> to vector<8x32xbf16>
    %cst_19 = arith.constant dense<0.000000e+00> : vector<8x128xf32>
    %116 = tpu.matmul %115, %1, %cst_19 {dimension_numbers = #tpu.dot_dimension_numbers<[1], [0], [0], [1], [0, 0, 1, 1], [], []>} : vector<8x32xbf16>, vector<32x128xbf16>, vector<8x128xf32> -> vector<8x128xf32>
    %117 = arith.addf %114, %116 : vector<8x128xf32>
    %118 = math.tanh %117 : vector<8x128xf32>
    %119 = arith.mulf %118, %12 : vector<8x128xf32>
    %120 = arith.addf %119, %15 : vector<8x128xf32>
    %121 = vector.extract_strided_slice %120 {offsets = [0, 0], sizes = [8, 32], strides = [1, 1]} : vector<8x128xf32> to vector<8x32xf32>
    %122 = vector.extract_strided_slice %120 {offsets = [0, 32], sizes = [8, 32], strides = [1, 1]} : vector<8x128xf32> to vector<8x32xf32>
    %123 = vector.extract_strided_slice %120 {offsets = [0, 64], sizes = [8, 32], strides = [1, 1]} : vector<8x128xf32> to vector<8x32xf32>
    %124 = vector.extract_strided_slice %120 {offsets = [0, 96], sizes = [8, 32], strides = [1, 1]} : vector<8x128xf32> to vector<8x32xf32>
    %125 = arith.mulf %124, %121 : vector<8x32xf32>
    %126 = arith.mulf %111, %122 : vector<8x32xf32>
    %127 = arith.addf %125, %126 : vector<8x32xf32>
    %128 = math.tanh %127 : vector<8x32xf32>
    %129 = arith.mulf %128, %123 : vector<8x32xf32>
    %130 = vector.extract_strided_slice %6 {offsets = [56, 0], sizes = [8, 128], strides = [1, 1]} : vector<64x128xf32> to vector<8x128xf32>
    %131 = arith.truncf %129 : vector<8x32xf32> to vector<8x32xbf16>
    %cst_20 = arith.constant dense<0.000000e+00> : vector<8x128xf32>
    %132 = tpu.matmul %131, %1, %cst_20 {dimension_numbers = #tpu.dot_dimension_numbers<[1], [0], [0], [1], [0, 0, 1, 1], [], []>} : vector<8x32xbf16>, vector<32x128xbf16>, vector<8x128xf32> -> vector<8x128xf32>
    %133 = arith.addf %130, %132 : vector<8x128xf32>
    %134 = math.tanh %133 : vector<8x128xf32>
    %135 = arith.mulf %134, %12 : vector<8x128xf32>
    %136 = arith.addf %135, %15 : vector<8x128xf32>
    %137 = vector.extract_strided_slice %136 {offsets = [0, 0], sizes = [8, 32], strides = [1, 1]} : vector<8x128xf32> to vector<8x32xf32>
    %138 = vector.extract_strided_slice %136 {offsets = [0, 32], sizes = [8, 32], strides = [1, 1]} : vector<8x128xf32> to vector<8x32xf32>
    %139 = vector.extract_strided_slice %136 {offsets = [0, 64], sizes = [8, 32], strides = [1, 1]} : vector<8x128xf32> to vector<8x32xf32>
    %140 = vector.extract_strided_slice %136 {offsets = [0, 96], sizes = [8, 32], strides = [1, 1]} : vector<8x128xf32> to vector<8x32xf32>
    %141 = arith.mulf %140, %137 : vector<8x32xf32>
    %142 = arith.mulf %127, %138 : vector<8x32xf32>
    %143 = arith.addf %141, %142 : vector<8x32xf32>
    %144 = math.tanh %143 : vector<8x32xf32>
    %145 = arith.mulf %144, %139 : vector<8x32xf32>
    %146 = arith.truncf %145 : vector<8x32xf32> to vector<8x32xbf16>
    %c0_21 = arith.constant 0 : index
    %c0_22 = arith.constant 0 : index
    %147 = vector.load %arg4[%c0_21, %c0_22] : memref<32x128xbf16, #tpu.memory_space<vmem>>, vector<32x128xbf16>
    %cst_23 = arith.constant dense<0.000000e+00> : vector<8x128xf32>
    %148 = tpu.matmul %146, %147, %cst_23 {dimension_numbers = #tpu.dot_dimension_numbers<[1], [0], [0], [1], [0, 0, 1, 1], [], []>} : vector<8x32xbf16>, vector<32x128xbf16>, vector<8x128xf32> -> vector<8x128xf32>
    %c0_24 = arith.constant 0 : index
    %c0_25 = arith.constant 0 : index
    %149 = vector.load %arg5[%c0_24, %c0_25] : memref<1x128xf32, #tpu.memory_space<vmem>>, vector<1x128xf32>
    %150 = vector.broadcast %149 : vector<1x128xf32> to vector<8x128xf32>
    %151 = arith.addf %148, %150 : vector<8x128xf32>
    %152 = tpu.iota {dimensions = array<i32: 1>} : vector<8x128xi32>
    %c4_i32 = arith.constant 4 : i32
    %153 = vector.broadcast %c4_i32 : i32 to vector<8x128xi32>
    %154 = arith.cmpi slt, %152, %153 : vector<8x128xi32>
    %cst_26 = arith.constant -1.000000e+30 : f32
    %155 = vector.broadcast %cst_26 : f32 to vector<8x128xf32>
    %156 = arith.select %154, %151, %155 : vector<8x128xi1>, vector<8x128xf32>
    %cst_27 = arith.constant dense<0xFF800000> : vector<8xf32>
    %157 = vector.multi_reduction <maximumf>, %156, %cst_27 [1] : vector<8x128xf32> to vector<8xf32>
    %158 = vector.shape_cast %157 : vector<8xf32> to vector<8x1xf32>
    %159 = vector.broadcast %158 : vector<8x1xf32> to vector<8x128xf32>
    %160 = arith.subf %151, %159 : vector<8x128xf32>
    %161 = math.exp %160 : vector<8x128xf32>
    %cst_28 = arith.constant 0.000000e+00 : f32
    %162 = vector.broadcast %cst_28 : f32 to vector<8x128xf32>
    %163 = arith.select %154, %161, %162 : vector<8x128xi1>, vector<8x128xf32>
    %cst_29 = arith.constant dense<0.000000e+00> : vector<8xf32>
    %164 = vector.multi_reduction <add>, %163, %cst_29 [1] : vector<8x128xf32> to vector<8xf32>
    %165 = vector.shape_cast %164 : vector<8xf32> to vector<8x1xf32>
    %166 = math.log %165 : vector<8x1xf32>
    %167 = vector.broadcast %166 : vector<8x1xf32> to vector<8x128xf32>
    %168 = arith.subf %160, %167 : vector<8x128xf32>
    %c0_30 = arith.constant 0 : index
    %c0_31 = arith.constant 0 : index
    %169 = vector.load %arg6[%c0_30, %c0_31] : memref<8x128xf32, #tpu.memory_space<vmem>>, vector<8x128xf32>
    tpu.vector_store %arg6[%c0_30, %c0_31], %168 {strides = array<i32>} : memref<8x128xf32, #tpu.memory_space<vmem>>, vector<8x128xf32>,
    return
  }
}

</mosaic_0001>

<llo_original>
// kernel: tpu_custom_call.1
$region0: #{tpu_custom_call.1}
  #allocation0 [shape = 'u32[]', space=smem, size = 0x4, offset = 0x4, fixed_abs, tag = 'smem constant byte address 0x4 - core index']
  #allocation1 [shape = 'u32[144,128]{1,0:T(1,128)}', space=vmem, size = 0x12000, scoped, tag = 'internal scratch']
  %s0 = inlined_call_operand.vmem [shape: bf16[64,16], index: 0, kind: input, shape index: {}]
  %s1 = inlined_call_operand.vmem [shape: bf16[16,128], index: 1, kind: input, shape index: {}]
  %s2 = inlined_call_operand.vmem [shape: bf16[32,128], index: 2, kind: input, shape index: {}]
  %s3 = inlined_call_operand.vmem [shape: f32[1,128], index: 3, kind: input, shape index: {}]
  %s4 = inlined_call_operand.vmem [shape: bf16[32,128], index: 4, kind: input, shape index: {}]
  %s5 = inlined_call_operand.vmem [shape: f32[1,128], index: 5, kind: input, shape index: {}]
  %s6 = inlined_call_operand.hbm [shape: f32[8,128], index: 6, kind: output, shape index: {}]
  %s7 = sld [smem:[#allocation0]]
  $region34: #{tpu_custom_call.1} parent=0
    _
  %s9 = ssub.s32 1, %s7
  %s10 = scalar_select 0, %s9, %s7
  $region1: #{tpu_custom_call.1} parent=0
    #allocation2 [shape = 'u8[4096]{0}', space=vmem, size = 0x1000, scoped, tag = 'output window, operand 0, single buffered']
    #allocation3 [shape = 's32[1]{0}', space=sflag, size = 0x4, scoped, tag = 'scoped memory for tpu_custom_call.1']
    %11 = vsyncpa [#allocation3], 0
    // Predicated region
    $region2: #{tpu_custom_call.1} parent=1 // pred_check
      _
    $region3: #{tpu_custom_call.1} parent=1 // pred_check_branch
      %13 = sbr.rel (0) target = $region5
    $region4: #{tpu_custom_call.1} parent=1 // pred_region
      _
    $region5: #{tpu_custom_call.1} parent=1 // pred_fallthru
      _
    // Predicated region
    $region6: #{tpu_custom_call.1} parent=1 // pred_check
      _
    $region7: #{tpu_custom_call.1} parent=1 // pred_check_branch
      %15 = sbr.rel (0) target = $region9
    $region8: #{tpu_custom_call.1} parent=1 // pred_region
      _
    $region9: #{tpu_custom_call.1} parent=1 // pred_fallthru
      _
    // Predicated region
    $region10: #{tpu_custom_call.1} parent=1 // pred_check
      _
    $region11: #{tpu_custom_call.1} parent=1 // pred_check_branch
      %17 = sbr.rel (0) target = $region13
    $region12: #{tpu_custom_call.1} parent=1 // pred_region
      _
    $region13: #{tpu_custom_call.1} parent=1 // pred_fallthru
      _
    // Predicated region
    $region14: #{tpu_custom_call.1} parent=1 // pred_check
      _
    $region15: #{tpu_custom_call.1} parent=1 // pred_check_branch
      %19 = sbr.rel (0) target = $region17
    $region16: #{tpu_custom_call.1} parent=1 // pred_region
      _
    $region17: #{tpu_custom_call.1} parent=1 // pred_fallthru
      _
    // Predicated region
    $region18: #{tpu_custom_call.1} parent=1 // pred_check
      _
    $region19: #{tpu_custom_call.1} parent=1 // pred_check_branch
      %21 = sbr.rel (0) target = $region21
    $region20: #{tpu_custom_call.1} parent=1 // pred_region
      _
    $region21: #{tpu_custom_call.1} parent=1 // pred_fallthru
      _
    // Predicated region
    $region22: #{tpu_custom_call.1} parent=1 // pred_check
      _
    $region23: #{tpu_custom_call.1} parent=1 // pred_check_branch
      %23 = sbr.rel (0) target = $region25
    $region24: #{tpu_custom_call.1} parent=1 // pred_region
      _
    $region25: #{tpu_custom_call.1} parent=1 // pred_fallthru
      _
    %v25 = vld [vmem:[%s1] sm:$0xf]
    %v26 = vld [vmem:[%s1 + $0x4] sm:$0xf]
    %v27 = vld [vmem:[%s2] sm:$0xf]
    %v28 = vld [vmem:[%s2 + $0x4] sm:$0xf]
    %v29 = vld [vmem:[%s2 + $0x8] sm:$0xf]
    %v30 = vld [vmem:[%s2 + $0xc] sm:$0xf]
    %v31 = vld [vmem:[%s3] sm:$0x1]
    %v32 = vld [vmem:[%s0] sm:$0xf]
    %v33 = vld [vmem:[%s0 + $0x4] sm:$0xf]
    %v34 = vld [vmem:[%s0 + $0x8] sm:$0xf]
    %v35 = vld [vmem:[%s0 + $0xc] sm:$0xf]
    %v36 = vld [vmem:[%s0 + $0x10] sm:$0xf]
    %v37 = vld [vmem:[%s0 + $0x14] sm:$0xf]
    %v38 = vld [vmem:[%s0 + $0x18] sm:$0xf]
    %v39 = vld [vmem:[%s0 + $0x1c] sm:$0xf]
    %v41 = vlaneseq
    %v42 = vshrl.u32 %v41, 7
    %v43 = vsub.s32 0, %v42
    %v44 = vrot.slane %v31, %v43
    %v54 = vunpack.c.l.b16 %v32
    %v55 = vunpack.c.l.b16 %v33
    %v56 = vunpack.c.l.b16 %v34
    %v57 = vunpack.c.l.b16 %v35
    %v58 = vunpack.c.l.b16 %v36
    %v59 = vunpack.c.l.b16 %v37
    %v60 = vunpack.c.l.b16 %v38
    %v61 = vunpack.c.l.b16 %v39
    %v62 = vpack.c.b16 %v55, %v54
    %v63 = vpack.c.b16 %v57, %v56
    %v64 = vpack.c.b16 %v59, %v58
    %v65 = vpack.c.b16 %v61, %v60
    %v68 = vunpack.c.l.b16 %v25
    %v69 = vunpack.c.l.b16 %v26
    %v70 = vpack.c.b16 %v69, %v68
    %vm72 = vcmask 130048
    %v74 = vsel %vm72, %v62, 0
    %v77 = vsel %vm72, %v63, 0
    %v80 = vsel %vm72, %v64, 0
    %v83 = vsel %vm72, %v65, 0
    %85 = vmatprep.subr.bf16.mxu0 0
    %86 = vmatpush1.bf16.msra.mxu0 %v70
    %87 = vmatprep.subr.bf16.mxu0 0
    %88 = vmatpush1.bf16.msra.mxu0 0
    %89 = vmatprep.subr.bf16.mxu0 0
    %90 = vmatpush1.bf16.msra.mxu0 0
    %91 = vmatprep.subr.bf16.mxu0 0
    %92 = vmatpush1.bf16.msra.mxu0 0
    %93 = vmatprep.subr.bf16.mxu0 0
    %94 = vmatpush1.bf16.msra.mxu0 0
    %95 = vmatprep.subr.bf16.mxu0 0
    %96 = vmatpush1.bf16.msra.mxu0 0
    %97 = vmatprep.subr.bf16.mxu0 0
    %98 = vmatpush1.bf16.msra.mxu0 0
    %99 = vmatprep.subr.bf16.mxu0 0
    %100 = vmatpush1.bf16.msra.mxu0 0
    %101 = vmatprep.subr.bf16.mxu0 0
    %102 = vmatpush1.bf16.msra.mxu0 0
    %103 = vmatprep.subr.bf16.mxu0 0
    %104 = vmatpush1.bf16.msra.mxu0 0
    %105 = vmatprep.subr.bf16.mxu0 0
    %106 = vmatpush1.bf16.msra.mxu0 0
    %107 = vmatprep.subr.bf16.mxu0 0
    %108 = vmatpush1.bf16.msra.mxu0 0
    %109 = vmatprep.subr.bf16.mxu0 0
    %110 = vmatpush1.bf16.msra.mxu0 0
    %111 = vmatprep.subr.bf16.mxu0 0
    %112 = vmatpush1.bf16.msra.mxu0 0
    %113 = vmatprep.subr.bf16.mxu0 0
    %114 = vmatpush1.bf16.msra.mxu0 0
    %115 = vmatprep.subr.bf16.mxu0 0
    %116 = vmatpush1.bf16.msra.mxu0 0
    %117 = vmatprep.mubr.bf16.mxu0 0
    %118 = vmatmul.mubr.bf16.gmra.mrb[0].mxu0 %v74
    %v119 = vpop.f32.mrb[0].mxu0
    %v120 = vadd.f32 %v44, %v119
    %v121 = vpop.f32.mrb[0].mxu0
    %v122 = vpop.f32.mrb[0].mxu0
    %v123 = vadd.f32 %v44, %v122
    %v124 = vpop.f32.mrb[0].mxu0
    %125 = vmatprep.mubr.bf16.mxu0 0
    %126 = vmatmul.mubr.bf16.gmra.mrb[0].mxu0 %v77
    %v127 = vpop.f32.mrb[0].mxu0
    %v128 = vadd.f32 %v44, %v127
    %v129 = vpop.f32.mrb[0].mxu0
    %v130 = vpop.f32.mrb[0].mxu0
    %v131 = vadd.f32 %v44, %v130
    %v132 = vpop.f32.mrb[0].mxu0
    %133 = vmatprep.mubr.bf16.mxu0 0
    %134 = vmatmul.mubr.bf16.gmra.mrb[0].mxu0 %v80
    %v135 = vpop.f32.mrb[0].mxu0
    %v136 = vadd.f32 %v44, %v135
    %v137 = vpop.f32.mrb[0].mxu0
    %v138 = vpop.f32.mrb[0].mxu0
    %v139 = vadd.f32 %v44, %v138
    %v140 = vpop.f32.mrb[0].mxu0
    %141 = vmatprep.mubr.bf16.mxu0 0
    %142 = vmatmul.mubr.bf16.gmra.mrb[0].mxu0 %v83
    %v143 = vpop.f32.mrb[0].mxu0
    %v144 = vadd.f32 %v44, %v143
    %v145 = vpop.f32.mrb[0].mxu0
    %v146 = vpop.f32.mrb[0].mxu0
    %v147 = vadd.f32 %v44, %v146
    %v148 = vpop.f32.mrb[0].mxu0
    %149 = vdwg.mxu0
    %v150 = vlaneseq
    %v151 = vand.u32 %v150, 127
    %vm152 = vcmp.ge.s32.totalorder %v151, 96
    %v153 = vsel %vm152, 1.0, 0.5
    %v154 = vsel %vm152, 0.0, 0.5
    %v159 = vunpack.c.l.b16 %v27
    %v160 = vunpack.c.l.b16 %v28
    %v161 = vunpack.c.l.b16 %v29
    %v162 = vunpack.c.l.b16 %v30
    %v163 = vpack.c.b16 %v160, %v159
    %v164 = vpack.c.b16 %v162, %v161
    %vm167 = vcmask 261120
    %v169 = vsel %vm167, 0, 0
    %171 = vmatprep.subr.bf16.mxu0 0
    %172 = vmatpush1.bf16.msra.mxu0 %v163
    %173 = vmatprep.subr.bf16.mxu0 0
    %174 = vmatpush1.bf16.msra.mxu0 %v164
    %175 = vmatprep.subr.bf16.mxu0 0
    %176 = vmatpush1.bf16.msra.mxu0 0
    %177 = vmatprep.subr.bf16.mxu0 0
    %178 = vmatpush1.bf16.msra.mxu0 0
    %179 = vmatprep.subr.bf16.mxu0 0
    %180 = vmatpush1.bf16.msra.mxu0 0
    %181 = vmatprep.subr.bf16.mxu0 0
    %182 = vmatpush1.bf16.msra.mxu0 0
    %183 = vmatprep.subr.bf16.mxu0 0
    %184 = vmatpush1.bf16.msra.mxu0 0
    %185 = vmatprep.subr.bf16.mxu0 0
    %186 = vmatpush1.bf16.msra.mxu0 0
    %187 = vmatprep.subr.bf16.mxu0 0
    %188 = vmatpush1.bf16.msra.mxu0 0
    %189 = vmatprep.subr.bf16.mxu0 0
    %190 = vmatpush1.bf16.msra.mxu0 0
    %191 = vmatprep.subr.bf16.mxu0 0
    %192 = vmatpush1.bf16.msra.mxu0 0
    %193 = vmatprep.subr.bf16.mxu0 0
    %194 = vmatpush1.bf16.msra.mxu0 0
    %195 = vmatprep.subr.bf16.mxu0 0
    %196 = vmatpush1.bf16.msra.mxu0 0
    %197 = vmatprep.subr.bf16.mxu0 0
    %198 = vmatpush1.bf16.msra.mxu0 0
    %199 = vmatprep.subr.bf16.mxu0 0
    %200 = vmatpush1.bf16.msra.mxu0 0
    %201 = vmatprep.subr.bf16.mxu0 0
    %202 = vmatpush1.bf16.msra.mxu0 0
    %203 = vmatprep.mubr.bf16.mxu0 0
    %204 = vmatmul.mubr.bf16.gmra.mrb[0].mxu0 %v169
    %v205 = vpop.f32.mrb[0].mxu0
    %v206 = vadd.f32 0.0, %v205
    %v207 = vpop.f32.mrb[0].mxu0
    %v208 = vpop.f32.mrb[0].mxu0
    %v209 = vpop.f32.mrb[0].mxu0
    %210 = vdwg.mxu0
    %v211 = vadd.f32 %v120, %v206
    %v212 = vtanh.pop %v211
    %v213 = vmul.f32 %v212, %v153
    %v214 = vadd.f32 %v213, %v154
    %216 = vrot.lane.b32.xlu0 %v214, 96
    %v217 = vpop.permute.xlu0 %216
    %v219 = vmul.f32 %v214, %v217
    %v220 = vmul.f32 %v214, 0.0
    %222 = vrot.lane.b32.xlu0 %v220, 64
    %v223 = vpop.permute.xlu0 %222
    %v225 = vadd.f32 %v219, %v223
    %v226 = vtanh.pop %v225
    %227 = vrot.lane.b32.xlu0 %v214, 32
    %v228 = vpop.permute.xlu0 %227
    %v230 = vmul.f32 %v226, %v228
    %v231 = vpack.c.bf16 %v230, %v230
    %233 = vrot.lane.b32.xlu0 %v231, 32
    %v234 = vpop.permute.xlu0 %233
    %v236 = vsel %vm167, %v234, 0
    %238 = vmatprep.subr.bf16.mxu0 0
    %239 = vmatpush1.bf16.msra.mxu0 %v163
    %240 = vmatprep.subr.bf16.mxu0 0
    %241 = vmatpush1.bf16.msra.mxu0 %v164
    %242 = vmatprep.subr.bf16.mxu0 0
    %243 = vmatpush1.bf16.msra.mxu0 0
    %244 = vmatprep.subr.bf16.mxu0 0
    %245 = vmatpush1.bf16.msra.mxu0 0
    %246 = vmatprep.subr.bf16.mxu0 0
    %247 = vmatpush1.bf16.msra.mxu0 0
    %248 = vmatprep.subr.bf16.mxu0 0
    %249 = vmatpush1.bf16.msra.mxu0 0
    %250 = vmatprep.subr.bf16.mxu0 0
    %251 = vmatpush1.bf16.msra.mxu0 0
    %252 = vmatprep.subr.bf16.mxu0 0
    %253 = vmatpush1.bf16.msra.mxu0 0
    %254 = vmatprep.subr.bf16.mxu0 0
    %255 = vmatpush1.bf16.msra.mxu0 0
    %256 = vmatprep.subr.bf16.mxu0 0
    %257 = vmatpush1.bf16.msra.mxu0 0
    %258 = vmatprep.subr.bf16.mxu0 0
    %259 = vmatpush1.bf16.msra.mxu0 0
    %260 = vmatprep.subr.bf16.mxu0 0
    %261 = vmatpush1.bf16.msra.mxu0 0
    %262 = vmatprep.subr.bf16.mxu0 0
    %263 = vmatpush1.bf16.msra.mxu0 0
    %264 = vmatprep.subr.bf16.mxu0 0
    %265 = vmatpush1.bf16.msra.mxu0 0
    %266 = vmatprep.subr.bf16.mxu0 0
    %267 = vmatpush1.bf16.msra.mxu0 0
    %268 = vmatprep.subr.bf16.mxu0 0
    %269 = vmatpush1.bf16.msra.mxu0 0
    %270 = vmatprep.mubr.bf16.mxu0 0
    %271 = vmatmul.mubr.bf16.gmra.mrb[0].mxu0 %v236
    %v272 = vpop.f32.mrb[0].mxu0
    %v273 = vadd.f32 0.0, %v272
    %v274 = vpop.f32.mrb[0].mxu0
    %v275 = vpop.f32.mrb[0].mxu0
    %v276 = vpop.f32.mrb[0].mxu0
    %277 = vdwg.mxu0
    %v278 = vadd.f32 %v123, %v273
    %v279 = vtanh.pop %v278
    %v280 = vmul.f32 %v279, %v153
    %v281 = vadd.f32 %v280, %v154
    %283 = vrot.lane.b32.xlu0 %v281, 96
    %v284 = vpop.permute.xlu0 %283
    %v286 = vmul.f32 %v281, %v284
    %287 = vrot.lane.b32.xlu0 %v281, 64
    %v288 = vpop.permute.xlu0 %287
    %v290 = vmul.f32 %v225, %v288
    %v291 = vadd.f32 %v286, %v290
    %v292 = vtanh.pop %v291
    %293 = vrot.lane.b32.xlu0 %v281, 32
    %v294 = vpop.permute.xlu0 %293
    %v296 = vmul.f32 %v292, %v294
    %v297 = vpack.c.bf16 %v296, %v296
    %299 = vrot.lane.b32.xlu0 %v297, 32
    %v300 = vpop.permute.xlu0 %299
    %v302 = vsel %vm167, %v300, 0
    %304 = vmatprep.subr.bf16.mxu0 0
    %305 = vmatpush1.bf16.msra.mxu0 %v163
    %306 = vmatprep.subr.bf16.mxu0 0
    %307 = vmatpush1.bf16.msra.mxu0 %v164
    %308 = vmatprep.subr.bf16.mxu0 0
    %309 = vmatpush1.bf16.msra.mxu0 0
    %310 = vmatprep.subr.bf16.mxu0 0
    %311 = vmatpush1.bf16.msra.mxu0 0
    %312 = vmatprep.subr.bf16.mxu0 0
    %313 = vmatpush1.bf16.msra.mxu0 0
    %314 = vmatprep.subr.bf16.mxu0 0
    %315 = vmatpush1.bf16.msra.mxu0 0
    %316 = vmatprep.subr.bf16.mxu0 0
    %317 = vmatpush1.bf16.msra.mxu0 0
    %318 = vmatprep.subr.bf16.mxu0 0
    %319 = vmatpush1.bf16.msra.mxu0 0
    %320 = vmatprep.subr.bf16.mxu0 0
    %321 = vmatpush1.bf16.msra.mxu0 0
    %322 = vmatprep.subr.bf16.mxu0 0
    %323 = vmatpush1.bf16.msra.mxu0 0
    %324 = vmatprep.subr.bf16.mxu0 0
    %325 = vmatpush1.bf16.msra.mxu0 0
    %326 = vmatprep.subr.bf16.mxu0 0
    %327 = vmatpush1.bf16.msra.mxu0 0
    %328 = vmatprep.subr.bf16.mxu0 0
    %329 = vmatpush1.bf16.msra.mxu0 0
    %330 = vmatprep.subr.bf16.mxu0 0
    %331 = vmatpush1.bf16.msra.mxu0 0
    %332 = vmatprep.subr.bf16.mxu0 0
    %333 = vmatpush1.bf16.msra.mxu0 0
    %334 = vmatprep.subr.bf16.mxu0 0
    %335 = vmatpush1.bf16.msra.mxu0 0
    %336 = vmatprep.mubr.bf16.mxu0 0
    %337 = vmatmul.mubr.bf16.gmra.mrb[0].mxu0 %v302
    %v338 = vpop.f32.mrb[0].mxu0
    %v339 = vadd.f32 0.0, %v338
    %v340 = vpop.f32.mrb[0].mxu0
    %v341 = vpop.f32.mrb[0].mxu0
    %v342 = vpop.f32.mrb[0].mxu0
    %343 = vdwg.mxu0
    %v344 = vadd.f32 %v128, %v339
    %v345 = vtanh.pop %v344
    %v346 = vmul.f32 %v345, %v153
    %v347 = vadd.f32 %v346, %v154
    %349 = vrot.lane.b32.xlu0 %v347, 96
    %v350 = vpop.permute.xlu0 %349
    %v352 = vmul.f32 %v347, %v350
    %353 = vrot.lane.b32.xlu0 %v347, 64
    %v354 = vpop.permute.xlu0 %353
    %v356 = vmul.f32 %v291, %v354
    %v357 = vadd.f32 %v352, %v356
    %v358 = vtanh.pop %v357
    %359 = vrot.lane.b32.xlu0 %v347, 32
    %v360 = vpop.permute.xlu0 %359
    %v362 = vmul.f32 %v358, %v360
    %v363 = vpack.c.bf16 %v362, %v362
    %365 = vrot.lane.b32.xlu0 %v363, 32
    %v366 = vpop.permute.xlu0 %365
    %v368 = vsel %vm167, %v366, 0
    %370 = vmatprep.subr.bf16.mxu0 0
    %371 = vmatpush1.bf16.msra.mxu0 %v163
    %372 = vmatprep.subr.bf16.mxu0 0
    %373 = vmatpush1.bf16.msra.mxu0 %v164
    %374 = vmatprep.subr.bf16.mxu0 0
    %375 = vmatpush1.bf16.msra.mxu0 0
    %376 = vmatprep.subr.bf16.mxu0 0
    %377 = vmatpush1.bf16.msra.mxu0 0
    %378 = vmatprep.subr.bf16.mxu0 0
    %379 = vmatpush1.bf16.msra.mxu0 0
    %380 = vmatprep.subr.bf16.mxu0 0
    %381 = vmatpush1.bf16.msra.mxu0 0
    %382 = vmatprep.subr.bf16.mxu0 0
    %383 = vmatpush1.bf16.msra.mxu0 0
    %384 = vmatprep.subr.bf16.mxu0 0
    %385 = vmatpush1.bf16.msra.mxu0 0
    %386 = vmatprep.subr.bf16.mxu0 0
    %387 = vmatpush1.bf16.msra.mxu0 0
    %388 = vmatprep.subr.bf16.mxu0 0
    %389 = vmatpush1.bf16.msra.mxu0 0
    %390 = vmatprep.subr.bf16.mxu0 0
    %391 = vmatpush1.bf16.msra.mxu0 0
    %392 = vmatprep.subr.bf16.mxu0 0
    %393 = vmatpush1.bf16.msra.mxu0 0
    %394 = vmatprep.subr.bf16.mxu0 0
    %395 = vmatpush1.bf16.msra.mxu0 0
    %396 = vmatprep.subr.bf16.mxu0 0
    %397 = vmatpush1.bf16.msra.mxu0 0
    %398 = vmatprep.subr.bf16.mxu0 0
    %399 = vmatpush1.bf16.msra.mxu0 0
    %400 = vmatprep.subr.bf16.mxu0 0
    %401 = vmatpush1.bf16.msra.mxu0 0
    %402 = vmatprep.mubr.bf16.mxu0 0
    %403 = vmatmul.mubr.bf16.gmra.mrb[0].mxu0 %v368
    %v404 = vpop.f32.mrb[0].mxu0
    %v405 = vadd.f32 0.0, %v404
    %v406 = vpop.f32.mrb[0].mxu0
    %v407 = vpop.f32.mrb[0].mxu0
    %v408 = vpop.f32.mrb[0].mxu0
    %409 = vdwg.mxu0
    %v410 = vadd.f32 %v131, %v405
    %v411 = vtanh.pop %v410
    %v412 = vmul.f32 %v411, %v153
    %v413 = vadd.f32 %v412, %v154
    %415 = vrot.lane.b32.xlu0 %v413, 96
    %v416 = vpop.permute.xlu0 %415
    %v418 = vmul.f32 %v413, %v416
    %419 = vrot.lane.b32.xlu0 %v413, 64
    %v420 = vpop.permute.xlu0 %419
    %v422 = vmul.f32 %v357, %v420
    %v423 = vadd.f32 %v418, %v422
    %v424 = vtanh.pop %v423
    %425 = vrot.lane.b32.xlu0 %v413, 32
    %v426 = vpop.permute.xlu0 %425
    %v428 = vmul.f32 %v424, %v426
    %v429 = vpack.c.bf16 %v428, %v428
    %431 = vrot.lane.b32.xlu0 %v429, 32
    %v432 = vpop.permute.xlu0 %431
    %v434 = vsel %vm167, %v432, 0
    %436 = vmatprep.subr.bf16.mxu0 0
    %437 = vmatpush1.bf16.msra.mxu0 %v163
    %438 = vmatprep.subr.bf16.mxu0 0
    %439 = vmatpush1.bf16.msra.mxu0 %v164
    %440 = vmatprep.subr.bf16.mxu0 0
    %441 = vmatpush1.bf16.msra.mxu0 0
    %442 = vmatprep.subr.bf16.mxu0 0
    %443 = vmatpush1.bf16.msra.mxu0 0
    %444 = vmatprep.subr.bf16.mxu0 0
    %445 = vmatpush1.bf16.msra.mxu0 0
    %446 = vmatprep.subr.bf16.mxu0 0
    %447 = vmatpush1.bf16.msra.mxu0 0
    %448 = vmatprep.subr.bf16.mxu0 0
    %449 = vmatpush1.bf16.msra.mxu0 0
    %450 = vmatprep.subr.bf16.mxu0 0
    %451 = vmatpush1.bf16.msra.mxu0 0
    %452 = vmatprep.subr.bf16.mxu0 0
    %453 = vmatpush1.bf16.msra.mxu0 0
    %454 = vmatprep.subr.bf16.mxu0 0
    %455 = vmatpush1.bf16.msra.mxu0 0
    %456 = vmatprep.subr.bf16.mxu0 0
    %457 = vmatpush1.bf16.msra.mxu0 0
    %458 = vmatprep.subr.bf16.mxu0 0
    %459 = vmatpush1.bf16.msra.mxu0 0
    %460 = vmatprep.subr.bf16.mxu0 0
    %461 = vmatpush1.bf16.msra.mxu0 0
    %462 = vmatprep.subr.bf16.mxu0 0
    %463 = vmatpush1.bf16.msra.mxu0 0
    %464 = vmatprep.subr.bf16.mxu0 0
    %465 = vmatpush1.bf16.msra.mxu0 0
    %466 = vmatprep.subr.bf16.mxu0 0
    %467 = vmatpush1.bf16.msra.mxu0 0
    %468 = vmatprep.mubr.bf16.mxu0 0
    %469 = vmatmul.mubr.bf16.gmra.mrb[0].mxu0 %v434
    %v470 = vpop.f32.mrb[0].mxu0
    %v471 = vadd.f32 0.0, %v470
    %v472 = vpop.f32.mrb[0].mxu0
    %v473 = vpop.f32.mrb[0].mxu0
    %v474 = vpop.f32.mrb[0].mxu0
    %475 = vdwg.mxu0
    %v476 = vadd.f32 %v136, %v471
    %v477 = vtanh.pop %v476
    %v478 = vmul.f32 %v477, %v153
    %v479 = vadd.f32 %v478, %v154
    %481 = vrot.lane.b32.xlu0 %v479, 96
    %v482 = vpop.permute.xlu0 %481
    %v484 = vmul.f32 %v479, %v482
    %485 = vrot.lane.b32.xlu0 %v479, 64
    %v486 = vpop.permute.xlu0 %485
    %v488 = vmul.f32 %v423, %v486
    %v489 = vadd.f32 %v484, %v488
    %v490 = vtanh.pop %v489
    %491 = vrot.lane.b32.xlu0 %v479, 32
    %v492 = vpop.permute.xlu0 %491
    %v494 = vmul.f32 %v490, %v492
    %v495 = vpack.c.bf16 %v494, %v494
    %497 = vrot.lane.b32.xlu0 %v495, 32
    %v498 = vpop.permute.xlu0 %497
    %v500 = vsel %vm167, %v498, 0
    %502 = vmatprep.subr.bf16.mxu0 0
    %503 = vmatpush1.bf16.msra.mxu0 %v163
    %504 = vmatprep.subr.bf16.mxu0 0
    %505 = vmatpush1.bf16.msra.mxu0 %v164
    %506 = vmatprep.subr.bf16.mxu0 0
    %507 = vmatpush1.bf16.msra.mxu0 0
    %508 = vmatprep.subr.bf16.mxu0 0
    %509 = vmatpush1.bf16.msra.mxu0 0
    %510 = vmatprep.subr.bf16.mxu0 0
    %511 = vmatpush1.bf16.msra.mxu0 0
    %512 = vmatprep.subr.bf16.mxu0 0
    %513 = vmatpush1.bf16.msra.mxu0 0
    %514 = vmatprep.subr.bf16.mxu0 0
    %515 = vmatpush1.bf16.msra.mxu0 0
    %516 = vmatprep.subr.bf16.mxu0 0
    %517 = vmatpush1.bf16.msra.mxu0 0
    %518 = vmatprep.subr.bf16.mxu0 0
    %519 = vmatpush1.bf16.msra.mxu0 0
    %520 = vmatprep.subr.bf16.mxu0 0
    %521 = vmatpush1.bf16.msra.mxu0 0
    %522 = vmatprep.subr.bf16.mxu0 0
    %523 = vmatpush1.bf16.msra.mxu0 0
    %524 = vmatprep.subr.bf16.mxu0 0
    %525 = vmatpush1.bf16.msra.mxu0 0
    %526 = vmatprep.subr.bf16.mxu0 0
    %527 = vmatpush1.bf16.msra.mxu0 0
    %528 = vmatprep.subr.bf16.mxu0 0
    %529 = vmatpush1.bf16.msra.mxu0 0
    %530 = vmatprep.subr.bf16.mxu0 0
    %531 = vmatpush1.bf16.msra.mxu0 0
    %532 = vmatprep.subr.bf16.mxu0 0
    %533 = vmatpush1.bf16.msra.mxu0 0
    %534 = vmatprep.mubr.bf16.mxu0 0
    %535 = vmatmul.mubr.bf16.gmra.mrb[0].mxu0 %v500
    %v536 = vpop.f32.mrb[0].mxu0
    %v537 = vadd.f32 0.0, %v536
    %v538 = vpop.f32.mrb[0].mxu0
    %v539 = vpop.f32.mrb[0].mxu0
    %v540 = vpop.f32.mrb[0].mxu0
    %541 = vdwg.mxu0
    %v542 = vadd.f32 %v139, %v537
    %v543 = vtanh.pop %v542
    %v544 = vmul.f32 %v543, %v153
    %v545 = vadd.f32 %v544, %v154
    %547 = vrot.lane.b32.xlu0 %v545, 96
    %v548 = vpop.permute.xlu0 %547
    %v550 = vmul.f32 %v545, %v548
    %551 = vrot.lane.b32.xlu0 %v545, 64
    %v552 = vpop.permute.xlu0 %551
    %v554 = vmul.f32 %v489, %v552
    %v555 = vadd.f32 %v550, %v554
    %v556 = vtanh.pop %v555
    %557 = vrot.lane.b32.xlu0 %v545, 32
    %v558 = vpop.permute.xlu0 %557
    %v560 = vmul.f32 %v556, %v558
    %v561 = vpack.c.bf16 %v560, %v560
    %563 = vrot.lane.b32.xlu0 %v561, 32
    %v564 = vpop.permute.xlu0 %563
    %v566 = vsel %vm167, %v564, 0
    %568 = vmatprep.subr.bf16.mxu0 0
    %569 = vmatpush1.bf16.msra.mxu0 %v163
    %570 = vmatprep.subr.bf16.mxu0 0
    %571 = vmatpush1.bf16.msra.mxu0 %v164
    %572 = vmatprep.subr.bf16.mxu0 0
    %573 = vmatpush1.bf16.msra.mxu0 0
    %574 = vmatprep.subr.bf16.mxu0 0
    %575 = vmatpush1.bf16.msra.mxu0 0
    %576 = vmatprep.subr.bf16.mxu0 0
    %577 = vmatpush1.bf16.msra.mxu0 0
    %578 = vmatprep.subr.bf16.mxu0 0
    %579 = vmatpush1.bf16.msra.mxu0 0
    %580 = vmatprep.subr.bf16.mxu0 0
    %581 = vmatpush1.bf16.msra.mxu0 0
    %582 = vmatprep.subr.bf16.mxu0 0
    %583 = vmatpush1.bf16.msra.mxu0 0
    %584 = vmatprep.subr.bf16.mxu0 0
    %585 = vmatpush1.bf16.msra.mxu0 0
    %586 = vmatprep.subr.bf16.mxu0 0
    %587 = vmatpush1.bf16.msra.mxu0 0
    %588 = vmatprep.subr.bf16.mxu0 0
    %589 = vmatpush1.bf16.msra.mxu0 0
    %590 = vmatprep.subr.bf16.mxu0 0
    %591 = vmatpush1.bf16.msra.mxu0 0
    %592 = vmatprep.subr.bf16.mxu0 0
    %593 = vmatpush1.bf16.msra.mxu0 0
    %594 = vmatprep.subr.bf16.mxu0 0
    %595 = vmatpush1.bf16.msra.mxu0 0
    %596 = vmatprep.subr.bf16.mxu0 0
    %597 = vmatpush1.bf16.msra.mxu0 0
    %598 = vmatprep.subr.bf16.mxu0 0
    %599 = vmatpush1.bf16.msra.mxu0 0
    %600 = vmatprep.mubr.bf16.mxu0 0
    %601 = vmatmul.mubr.bf16.gmra.mrb[0].mxu0 %v566
    %v602 = vpop.f32.mrb[0].mxu0
    %v603 = vadd.f32 0.0, %v602
    %v604 = vpop.f32.mrb[0].mxu0
    %v605 = vpop.f32.mrb[0].mxu0
    %v606 = vpop.f32.mrb[0].mxu0
    %607 = vdwg.mxu0
    %v608 = vadd.f32 %v144, %v603
    %v609 = vtanh.pop %v608
    %v610 = vmul.f32 %v609, %v153
    %v611 = vadd.f32 %v610, %v154
    %613 = vrot.lane.b32.xlu0 %v611, 96
    %v614 = vpop.permute.xlu0 %613
    %v616 = vmul.f32 %v611, %v614
    %617 = vrot.lane.b32.xlu0 %v611, 64
    %v618 = vpop.permute.xlu0 %617
    %v620 = vmul.f32 %v555, %v618
    %v621 = vadd.f32 %v616, %v620
    %v622 = vtanh.pop %v621
    %623 = vrot.lane.b32.xlu0 %v611, 32
    %v624 = vpop.permute.xlu0 %623
    %v626 = vmul.f32 %v622, %v624
    %v627 = vpack.c.bf16 %v626, %v626
    %629 = vrot.lane.b32.xlu0 %v627, 32
    %v630 = vpop.permute.xlu0 %629
    %v632 = vsel %vm167, %v630, 0
    %634 = vmatprep.subr.bf16.mxu0 0
    %635 = vmatpush1.bf16.msra.mxu0 %v163
    %636 = vmatprep.subr.bf16.mxu0 0
    %637 = vmatpush1.bf16.msra.mxu0 %v164
    %638 = vmatprep.subr.bf16.mxu0 0
    %639 = vmatpush1.bf16.msra.mxu0 0
    %640 = vmatprep.subr.bf16.mxu0 0
    %641 = vmatpush1.bf16.msra.mxu0 0
    %642 = vmatprep.subr.bf16.mxu0 0
    %643 = vmatpush1.bf16.msra.mxu0 0
    %644 = vmatprep.subr.bf16.mxu0 0
    %645 = vmatpush1.bf16.msra.mxu0 0
    %646 = vmatprep.subr.bf16.mxu0 0
    %647 = vmatpush1.bf16.msra.mxu0 0
    %648 = vmatprep.subr.bf16.mxu0 0
    %649 = vmatpush1.bf16.msra.mxu0 0
    %650 = vmatprep.subr.bf16.mxu0 0
    %651 = vmatpush1.bf16.msra.mxu0 0
    %652 = vmatprep.subr.bf16.mxu0 0
    %653 = vmatpush1.bf16.msra.mxu0 0
    %654 = vmatprep.subr.bf16.mxu0 0
    %655 = vmatpush1.bf16.msra.mxu0 0
    %656 = vmatprep.subr.bf16.mxu0 0
    %657 = vmatpush1.bf16.msra.mxu0 0
    %658 = vmatprep.subr.bf16.mxu0 0
    %659 = vmatpush1.bf16.msra.mxu0 0
    %660 = vmatprep.subr.bf16.mxu0 0
    %661 = vmatpush1.bf16.msra.mxu0 0
    %662 = vmatprep.subr.bf16.mxu0 0
    %663 = vmatpush1.bf16.msra.mxu0 0
    %664 = vmatprep.subr.bf16.mxu0 0
    %665 = vmatpush1.bf16.msra.mxu0 0
    %666 = vmatprep.mubr.bf16.mxu0 0
    %667 = vmatmul.mubr.bf16.gmra.mrb[0].mxu0 %v632
    %v668 = vpop.f32.mrb[0].mxu0
    %v669 = vadd.f32 0.0, %v668
    %v670 = vpop.f32.mrb[0].mxu0
    %v671 = vpop.f32.mrb[0].mxu0
    %v672 = vpop.f32.mrb[0].mxu0
    %673 = vdwg.mxu0
    %v674 = vadd.f32 %v147, %v669
    %v675 = vtanh.pop %v674
    %v676 = vmul.f32 %v675, %v153
    %v677 = vadd.f32 %v676, %v154
    %679 = vrot.lane.b32.xlu0 %v677, 96
    %v680 = vpop.permute.xlu0 %679
    %v682 = vmul.f32 %v677, %v680
    %683 = vrot.lane.b32.xlu0 %v677, 64
    %v684 = vpop.permute.xlu0 %683
    %v686 = vmul.f32 %v621, %v684
    %v687 = vadd.f32 %v682, %v686
    %v688 = vtanh.pop %v687
    %689 = vrot.lane.b32.xlu0 %v677, 32
    %v690 = vpop.permute.xlu0 %689
    %v692 = vmul.f32 %v688, %v690
    %v693 = vpack.c.bf16 %v692, %v692
    %v694 = vld [vmem:[%s4] sm:$0xf]
    %v695 = vld [vmem:[%s4 + $0x4] sm:$0xf]
    %v696 = vld [vmem:[%s4 + $0x8] sm:$0xf]
    %v697 = vld [vmem:[%s4 + $0xc] sm:$0xf]
    %v698 = vld [vmem:[%s5] sm:$0x1]
    %v700 = vlaneseq
    %v701 = vshrl.u32 %v700, 7
    %v702 = vsub.s32 0, %v701
    %v703 = vrot.slane %v698, %v702
    %706 = vrot.lane.b32.xlu0 %v693, 32
    %v707 = vpop.permute.xlu0 %706
    %v712 = vunpack.c.l.b16 %v694
    %v713 = vunpack.c.l.b16 %v695
    %v714 = vunpack.c.l.b16 %v696
    %v715 = vunpack.c.l.b16 %v697
    %v716 = vpack.c.b16 %v713, %v712
    %v717 = vpack.c.b16 %v715, %v714
    %v721 = vsel %vm167, %v707, 0
    %723 = vmatprep.subr.bf16.mxu0 0
    %724 = vmatpush1.bf16.msra.mxu0 %v716
    %725 = vmatprep.subr.bf16.mxu0 0
    %726 = vmatpush1.bf16.msra.mxu0 %v717
    %727 = vmatprep.subr.bf16.mxu0 0
    %728 = vmatpush1.bf16.msra.mxu0 0
    %729 = vmatprep.subr.bf16.mxu0 0
    %730 = vmatpush1.bf16.msra.mxu0 0
    %731 = vmatprep.subr.bf16.mxu0 0
    %732 = vmatpush1.bf16.msra.mxu0 0
    %733 = vmatprep.subr.bf16.mxu0 0
    %734 = vmatpush1.bf16.msra.mxu0 0
    %735 = vmatprep.subr.bf16.mxu0 0
    %736 = vmatpush1.bf16.msra.mxu0 0
    %737 = vmatprep.subr.bf16.mxu0 0
    %738 = vmatpush1.bf16.msra.mxu0 0
    %739 = vmatprep.subr.bf16.mxu0 0
    %740 = vmatpush1.bf16.msra.mxu0 0
    %741 = vmatprep.subr.bf16.mxu0 0
    %742 = vmatpush1.bf16.msra.mxu0 0
    %743 = vmatprep.subr.bf16.mxu0 0
    %744 = vmatpush1.bf16.msra.mxu0 0
    %745 = vmatprep.subr.bf16.mxu0 0
    %746 = vmatpush1.bf16.msra.mxu0 0
    %747 = vmatprep.subr.bf16.mxu0 0
    %748 = vmatpush1.bf16.msra.mxu0 0
    %749 = vmatprep.subr.bf16.mxu0 0
    %750 = vmatpush1.bf16.msra.mxu0 0
    %751 = vmatprep.subr.bf16.mxu0 0
    %752 = vmatpush1.bf16.msra.mxu0 0
    %753 = vmatprep.subr.bf16.mxu0 0
    %754 = vmatpush1.bf16.msra.mxu0 0
    %755 = vmatprep.mubr.bf16.mxu0 0
    %756 = vmatmul.mubr.bf16.gmra.mrb[0].mxu0 %v721
    %v757 = vpop.f32.mrb[0].mxu0
    %v758 = vadd.f32 %v703, %v757
    %v759 = vpop.f32.mrb[0].mxu0
    %v760 = vpop.f32.mrb[0].mxu0
    %v761 = vpop.f32.mrb[0].mxu0
    %762 = vdwg.mxu0
    %vm763 = vcmp.lt.s32.totalorder %v151, 4
    %v764 = vsel %vm763, %v758, -1e+30
    %765 = vmax.xlane.f32.xlu0 %v764
    %v766 = vpop.xlane.xlu0 %765
    %v767 = vsub.f32 %v758, %v766
    %v768 = vmul.f32 %v767, 1.442695
    %v769 = vpow.pop %v768
    %v770 = vsel %vm763, %v769, 0.0
    %771 = vadd.xlane.f32.xlu0 %v770
    %v772 = vpop.xlane.xlu0 %771
    %v773 = vlog2.pop %v772
    %v774 = vmul.f32 %v773, 0.6931472
    %v775 = vsub.f32 %v767, %v774
    %776 = vst [vmem:[#allocation2] sm:$0xff] %v775
    // Predicated region
    $region26: #{tpu_custom_call.1} parent=1 // pred_check
      _
    $region27: #{tpu_custom_call.1} parent=1 // pred_check_branch
      %778 = sbr.rel (0) target = $region29
    $region28: #{tpu_custom_call.1} parent=1 // pred_region
      %s780 = ssub.s32 128, 128
      %781 = vsyncadd [#allocation3], %s780
      %s783 = sshll.u32 [#allocation2], 4
      %s784 = int_to_ptr.vmem [resolvable:$true] %s783
      %786 = dma.vmem_to_hbm [thread:$0]  %s784, 128, %s6, [#allocation3]
    $region29: #{tpu_custom_call.1} parent=1 // pred_fallthru
      _
    // Predicated region
    $region30: #{tpu_custom_call.1} parent=1 // pred_check
      _
    $region31: #{tpu_custom_call.1} parent=1 // pred_check_branch
      %788 = sbr.rel (0) target = $region33
    $region32: #{tpu_custom_call.1} parent=1 // pred_region
      %789 = dma.done [#allocation3], 128
    $region33: #{tpu_custom_call.1} parent=1 // pred_fallthru
      _
    %790 = vsyncpa [#allocation3], 1

</llo_original>
